<compile_context>
chip_gen: v6e
topology: v6e:2x2x1
jax: 0.10.0
libtpu: 0.0.40
codegen_flags: <defaults>
</compile_context>

<pallas_src>
import jax
import jax.numpy as jnp
from jax import lax
from jax.experimental import pallas as pl
from jax.experimental.pallas import tpu as pltpu

K = 3  # MaxPool2d kernel_size
S = 3  # stride defaults to kernel_size in torch.nn.MaxPool2d

_TILE_BUDGET = 24 * 1024 * 1024   # double-buffered (in + out) VMEM tiles
_VMEM_LIMIT = 48 * 1024 * 1024    # <= v7x 64 MiB/TC, well under v5e/v6e 128 MiB


def _round_up(a, b):
    return (a + b - 1) // b * b


def _choose_ncb(nc, h, w, oh, wd, itemsize):
    """Largest N*C block whose double-buffered padded (in + out) tiles fit the
    budget, capped at ceil(NC/2) so there are always >= 2 grid steps."""
    sub = max(8, 32 // itemsize)            # sublane tile: 8 f32 / 16 bf16 / 32 int8
    in_plane = _round_up(h, sub) * _round_up(w, 128) * itemsize
    out_plane = _round_up(oh, sub) * _round_up(wd, 128) * itemsize
    cap = max(1, _TILE_BUDGET // (2 * (in_plane + out_plane)))
    two_steps = max(1, pl.cdiv(nc, 2))
    return max(1, min(cap, two_steps, nc))


def maxpool2d(x):
    """MaxPool2d(kernel_size=3, stride=3, padding=0, ceil_mode=False) on NCHW."""
    N, C, H, W = x.shape
    OH = (H - K) // S + 1
    OW = (W - K) // S + 1
    NC = N * C
    Wd = (OW - 1) * S + 1          # dense window-start columns the kernel emits

    itemsize = jnp.dtype(x.dtype).itemsize
    ncb = _choose_ncb(NC, H, W, OH, Wd, itemsize)
    grid = (pl.cdiv(NC, ncb),)

    def kernel(x_ref, o_ref):
        # x_ref: (ncb, H, W)   -- native NCHW block, W on the lane axis
        # o_ref: (ncb, OH, Wd) -- 3x3 window max for every W start 0..Wd-1
        def body(oh, carry):
            h0 = oh * S
            d = None
            for kw in range(K):                               # static unroll (3)
                v = x_ref[:, pl.ds(h0, K), pl.ds(kw, Wd)]     # (ncb, K, Wd)
                m = jnp.max(v, axis=1, keepdims=True)         # (ncb, 1, Wd)
                d = m if d is None else jnp.maximum(d, m)
            o_ref[:, pl.ds(oh, 1), :] = d
            return carry

        lax.fori_loop(0, OH, body, 0)

    cost = pl.CostEstimate(
        flops=9 * NC * OH * Wd,
        transcendentals=0,
        bytes_accessed=(H * W + OH * Wd) * NC * itemsize,
    )

    dense = pl.pallas_call(
        kernel,
        out_shape=jax.ShapeDtypeStruct((NC, OH, Wd), x.dtype),
        grid=grid,
        in_specs=[pl.BlockSpec((ncb, H, W), lambda i: (i, 0, 0))],
        out_specs=pl.BlockSpec((ncb, OH, Wd), lambda i: (i, 0, 0)),
        compiler_params=pltpu.CompilerParams(
            dimension_semantics=("parallel",),
            vmem_limit_bytes=_VMEM_LIMIT,
        ),
        cost_estimate=cost,
    )(x.reshape(NC, H, W))

    # TODO(synk): fold this stride-3 lane subsample into the kernel once
    # lane-strided stores are portable across Mosaic versions; it is a small
    # XLA slice on an array ~3x smaller than the input (no transposes remain).
    out = dense[:, :, ::S]          # (NC, OH, OW)
    return out.reshape(N, C, OH, OW)


def _reference_maxpool2d(x):
    # Pure-JAX reference for correctness checking (not part of the kernel).
    return lax.reduce_window(
        x, -jnp.inf, lax.max,
        window_dimensions=(1, 1, K, K),
        window_strides=(1, 1, S, S),
        padding="VALID",
    )


if __name__ == "__main__":
    key = jax.random.PRNGKey(0)
    x = jax.random.normal(key, (2, 4, 16, 16), dtype=jnp.float32)

    y = maxpool2d(x)
    jax.block_until_ready(y)

    assert y.shape == (2, 4, 5, 5), y.shape
    y_ref = _reference_maxpool2d(x)
    assert jnp.allclose(y, y_ref), "Pallas maxpool mismatch vs reference"

    print("KERNEL_OK")
</pallas_src>

<mosaic_0001>
module attributes {stable_mosaic.version = 11 : i64} {
  func.func @kernel(%arg0: i32, %arg1: memref<4x16x16xf32, #tpu.memory_space<vmem>>, %arg2: memref<4x5x13xf32, #tpu.memory_space<vmem>>) attributes {dimension_semantics = [#tpu.dimension_semantics<parallel>], iteration_bounds = array<i64: 2>, scalar_prefetch = 0 : i64, scratch_operands = 0 : i64, tpu.core_type = #tpu.core_type<tc>, window_params = [{transform_indices = @transform_0, window_bounds = array<i64: 4, 16, 16>}, {transform_indices = @transform_1, window_bounds = array<i64: 4, 5, 13>}]} {
    %c0_i32 = arith.constant 0 : i32
    %c5_i32 = arith.constant 5 : i32
    %0 = arith.addi %c0_i32, %c5_i32 : i32
    %c1_i32 = arith.constant 1 : i32
    scf.for %arg3 = %c0_i32 to %0 step %c1_i32  : i32 {
      %c3_i32 = arith.constant 3 : i32
      %1 = arith.muli %arg3, %c3_i32 : i32
      %c0 = arith.constant 0 : index
      %2 = arith.index_cast %1 : i32 to index
      %c0_1 = arith.constant 0 : index
      %3 = vector.load %arg1[%c0, %2, %c0_1] : memref<4x16x16xf32, #tpu.memory_space<vmem>>, vector<4x3x13xf32>
      %cst = arith.constant dense<0xFF800000> : vector<4x13xf32>
      %4 = vector.multi_reduction <maximumf>, %3, %cst [1] : vector<4x3x13xf32> to vector<4x13xf32>
      %5 = vector.shape_cast %4 : vector<4x13xf32> to vector<4x1x13xf32>
      %c0_2 = arith.constant 0 : index
      %6 = arith.index_cast %1 : i32 to index
      %c1 = arith.constant 1 : index
      %7 = vector.load %arg1[%c0_2, %6, %c1] : memref<4x16x16xf32, #tpu.memory_space<vmem>>, vector<4x3x13xf32>
      %cst_3 = arith.constant dense<0xFF800000> : vector<4x13xf32>
      %8 = vector.multi_reduction <maximumf>, %7, %cst_3 [1] : vector<4x3x13xf32> to vector<4x13xf32>
      %9 = vector.shape_cast %8 : vector<4x13xf32> to vector<4x1x13xf32>
      %10 = arith.maximumf %5, %9 : vector<4x1x13xf32>
      %c0_4 = arith.constant 0 : index
      %11 = arith.index_cast %1 : i32 to index
      %c2 = arith.constant 2 : index
      %12 = vector.load %arg1[%c0_4, %11, %c2] : memref<4x16x16xf32, #tpu.memory_space<vmem>>, vector<4x3x13xf32>
      %cst_5 = arith.constant dense<0xFF800000> : vector<4x13xf32>
      %13 = vector.multi_reduction <maximumf>, %12, %cst_5 [1] : vector<4x3x13xf32> to vector<4x13xf32>
      %14 = vector.shape_cast %13 : vector<4x13xf32> to vector<4x1x13xf32>
      %15 = arith.maximumf %10, %14 : vector<4x1x13xf32>
      %c0_6 = arith.constant 0 : index
      %16 = arith.index_cast %arg3 : i32 to index
      %c0_7 = arith.constant 0 : index
      %17 = vector.load %arg2[%c0_6, %16, %c0_7] : memref<4x5x13xf32, #tpu.memory_space<vmem>>, vector<4x1x13xf32>
      tpu.vector_store %arg2[%c0_6, %16, %c0_7], %15 {strides = array<i32>} : memref<4x5x13xf32, #tpu.memory_space<vmem>>, vector<4x1x13xf32>,
    }
    %c5_i32_0 = arith.constant 5 : i32
    return
  }
  func.func @transform_0(%arg0: i32) -> (i32, i32, i32) {
    %c0_i32 = arith.constant 0 : i32
    %c0_i32_0 = arith.constant 0 : i32
    %c0_i32_1 = arith.constant 0 : i32
    return %arg0, %c0_i32, %c0_i32_0 : i32, i32, i32
  }
  func.func @transform_1(%arg0: i32) -> (i32, i32, i32) {
    %c0_i32 = arith.constant 0 : i32
    %c0_i32_0 = arith.constant 0 : i32
    %c0_i32_1 = arith.constant 0 : i32
    return %arg0, %c0_i32, %c0_i32_0 : i32, i32, i32
  }
}

</mosaic_0001>

<llo_original>
// kernel: tpu_custom_call.1
$region0: #{tpu_custom_call.1}
  #allocation0 [shape = 'u32[]', space=smem, size = 0x4, offset = 0x4, fixed_abs, tag = 'smem constant byte address 0x4 - core index']
  #allocation1 [shape = 'u32[144,128]{1,0:T(1,128)}', space=vmem, size = 0x12000, scoped, tag = 'internal scratch']
  %s0 = inlined_call_operand.hbm [shape: f32[8,16,16], index: 0, kind: input, shape index: {}]
  %s1 = inlined_call_operand.vmem [shape: f32[8,5,13], index: 1, kind: output, shape index: {}]
  %s2 = sld [smem:[#allocation0]]
  $region48: #{tpu_custom_call.1} parent=0
    _
  %s4 = ssub.s32 1, %s2
  %s5 = scalar_select 0, %s4, %s2
  $region1: #{tpu_custom_call.1} parent=0
    #allocation2 [shape = 'u8[65536]{0}', space=vmem, size = 0x10000, scoped, tag = 'input window, operand 0']
    #allocation3 [shape = 's32[2]{0}', space=sflag, size = 0x8, scoped, tag = 'scoped memory for tpu_custom_call.1']
    %6 = vsyncpa [#allocation3], 0
    %s7 = scalar_lea.sflag [#allocation3], 1
    %8 = vsyncpa %s7, 0
    loop: start=0, step=1, limit=4
    $region2: #{tpu_custom_call.1} parent=1 // loop_pre_header
      _
    $region3: #{tpu_custom_call.1} parent=1 // loop_header
      %s10 = sphi 0, %s14
      %p11 = scmp.ge.s32.totalorder %s10, 4
      %s20 = sphi 0, %s22
      %s23 = sphi 0, %s20
      %s24 = sphi 0, %s23
      %s40 = sphi 0, %s24
      %s46 = sphi 0, %s48
      %s49 = sphi 0, %s46
      %s50 = sphi 0, %s49
      %s66 = sphi 0, %s50
    $region4: #{tpu_custom_call.1} parent=1 // loop_header_branch
      %13 = sbr.rel (%p11) target = $region8
    $region5: #{tpu_custom_call.1} parent=1 // loop_body
      %s15 = ssub.s32 %s10, 1
      %s16 = ssub.s32 %s10, 2
      %s17 = sadd.s32 %s10, 1
      %s18 = ssub.s32 %s10, %s17
      %p19 = scmp.eq.s32.totalorder %s18, 0
      %s21 = sadd.s32 %s20, 1
      %s22 = scalar_select %p19, %s20, %s21
      %p25 = pneg %p19
      %p26 = scmp.eq.s32.totalorder %s10, 1
      %p27 = por %p25, %p26
      %p28 = scmp.ne.s32.totalorder %s20, %s23
      %p29 = scmp.eq.s32.totalorder %s10, 0
      %p30 = por %p28, %p29
      %p31 = scmp.ne.s32.totalorder %s20, %s23
      %p32 = scmp.eq.s32.totalorder %s15, 1
      %p33 = por %p31, %p32
      %p34 = scmp.ne.s32.totalorder %s23, %s24
      %p35 = scmp.eq.s32.totalorder %s15, 0
      %p36 = por %p34, %p35
      %p37 = scmp.ne.s32.totalorder %s23, %s24
      %p38 = scmp.eq.s32.totalorder %s16, 1
      %p39 = por %p37, %p38
      %p41 = scmp.ne.s32.totalorder %s24, %s40
      %p42 = scmp.eq.s32.totalorder %s16, 0
      %p43 = por %p41, %p42
      %s44 = ssub.s32 %s10, %s17
      %p45 = scmp.eq.s32.totalorder %s44, 0
      %s47 = sadd.s32 %s46, 1
      %s48 = scalar_select %p45, %s46, %s47
      %p51 = pneg %p45
      %p52 = scmp.eq.s32.totalorder %s10, 1
      %p53 = por %p51, %p52
      %p54 = scmp.ne.s32.totalorder %s46, %s49
      %p55 = scmp.eq.s32.totalorder %s10, 0
      %p56 = por %p54, %p55
      %p57 = scmp.ne.s32.totalorder %s46, %s49
      %p58 = scmp.eq.s32.totalorder %s15, 1
      %p59 = por %p57, %p58
      %p60 = scmp.ne.s32.totalorder %s49, %s50
      %p61 = scmp.eq.s32.totalorder %s15, 0
      %p62 = por %p60, %p61
      %p63 = scmp.ne.s32.totalorder %s49, %s50
      %p64 = scmp.eq.s32.totalorder %s16, 1
      %p65 = por %p63, %p64
      %p67 = scmp.ne.s32.totalorder %s50, %s66
      %p68 = scmp.eq.s32.totalorder %s16, 0
      %p69 = por %p67, %p68
      %p70 = scmp.le.s32.totalorder 1, %s10
      %p71 = scmp.lt.s32.totalorder %s10, 3
      %p72 = pnand %p70, %p71
      %p73 = pneg %p72
      // Predicated region
      $region9: #{tpu_custom_call.1} parent=5 // pred_check
        _
      $region10: #{tpu_custom_call.1} parent=5 // pred_check_branch
        %75 = sbr.rel (%p72) target = $region12
      $region11: #{tpu_custom_call.1} parent=5 // pred_region
        %s76 = ssub.s32 %s10, 1
      $region12: #{tpu_custom_call.1} parent=5 // pred_fallthru
        _
      %p77 = scmp.lt.s32.totalorder %s10, 2
      // Predicated region
      $region13: #{tpu_custom_call.1} parent=5 // pred_check
        %p78 = pneg %p77
      $region14: #{tpu_custom_call.1} parent=5 // pred_check_branch
        %80 = sbr.rel (%p78) target = $region16
      $region15: #{tpu_custom_call.1} parent=5 // pred_region
        // Predicated region
        $region17: #{tpu_custom_call.1} parent=15 // pred_check
          %p81 = pneg %p30
        $region18: #{tpu_custom_call.1} parent=15 // pred_check_branch
          %83 = sbr.rel (%p81) target = $region20
        $region19: #{tpu_custom_call.1} parent=15 // pred_region
          %s84 = sand.u32 %s20, 1
          %s85 = scalar_lea.sflag [#allocation3], %s84
          %s86 = sand.u32 %s20, 1
          %s87 = smul.addr %s86, 64
          %s88 = scalar_lea.vmem [#allocation2], %s87
          %s89 = smul.u32 4, %s10
          %s91 = ssub.s32 1024, 1024
          %92 = vsyncadd %s85, %s91
          %s93 = smul.addr %s89, 2
          %s94 = smul.addr %s93, 128
          %s95 = scalar_lea.hbm %s0, %s94
          %s96 = sshll.u32 %s88, 4
          %s97 = int_to_ptr.vmem [resolvable:$true] %s96
          %102 = dma.hbm_to_vmem [thread:$0]  %s95, 1024, %s97, %s85, 128, 128, 8
        $region20: #{tpu_custom_call.1} parent=15 // pred_fallthru
          _
      $region16: #{tpu_custom_call.1} parent=5 // pred_fallthru
        _
      %p103 = scmp.le.s32.totalorder 1, %s10
      %p104 = scmp.lt.s32.totalorder %s10, 3
      %p105 = pnand %p103, %p104
      %p106 = pneg %p105
      // Predicated region
      $region21: #{tpu_custom_call.1} parent=5 // pred_check
        _
      $region22: #{tpu_custom_call.1} parent=5 // pred_check_branch
        %108 = sbr.rel (%p105) target = $region24
      $region23: #{tpu_custom_call.1} parent=5 // pred_region
        %s109 = ssub.s32 %s10, 1
        %s110 = sand.u32 %s23, 1
        %s111 = scalar_lea.sflag [#allocation3], %s110
        %s112 = sand.u32 %s23, 1
        %s113 = smul.addr %s112, 64
        %s114 = scalar_lea.vmem [#allocation2], %s113
        // Predicated region
        $region25: #{tpu_custom_call.1} parent=23 // pred_check
          %p115 = pneg %p36
        $region26: #{tpu_custom_call.1} parent=23 // pred_check_branch
          %117 = sbr.rel (%p115) target = $region28
        $region27: #{tpu_custom_call.1} parent=23 // pred_region
          %118 = dma.done %s111, 1024
        $region28: #{tpu_custom_call.1} parent=23 // pred_fallthru
          _
        %s119 = sand.u32 %s23, 1
        %s120 = scalar_lea.sflag [#allocation3], %s119
        %s121 = sand.u32 %s23, 1
        %s122 = smul.addr %s121, 64
        %s123 = scalar_lea.vmem [#allocation2], %s122
        %p124 = pneg %p36
        %p125 = pneg %p33
        %p126 = pneg %p62
        %p127 = pneg %p59
        %s128 = smul.u32 4, %s15
        %p129 = scmp.lt.s32.totalorder %s128, 7
        %s130 = scalar_select %p129, %s128, 7
        %s131 = smul.addr %s130, 8
        %s132 = scalar_lea.vmem %s1, %s131
        %s133 = smul.u32 4, %s15
        %s134 = smul.u32 4, %s15
        %p135 = scmp.lt.s32.totalorder %s134, 7
        %s136 = scalar_select %p135, %s134, 7
        %s137 = smul.addr %s136, 8
        %s138 = scalar_lea.vmem %s1, %s137
        %s139 = smul.u32 4, %s15
        loop: start=0, step=1, limit=5
        $region29: #{tpu_custom_call.1} parent=23 // loop_pre_header
          _
        $region30: #{tpu_custom_call.1} parent=23 // loop_header
          %s141 = sphi 0, %s145
          %p142 = scmp.ge.s32.totalorder %s141, 5
        $region31: #{tpu_custom_call.1} parent=23 // loop_header_branch
          %144 = sbr.rel (%p142) target = $region35
        $region32: #{tpu_custom_call.1} parent=23 // loop_body
          %s146 = smul.u32 %s141, 3
          %s147 = scalar_lea.vmem %s114, %s146 [#allocation2]
          %v148 = vld [vmem:[%s147] sm:$0x7]
          %v149 = vld [vmem:[%s147 + $0x10] sm:$0x7]
          %v150 = vld [vmem:[%s147 + $0x20] sm:$0x7]
          %v151 = vld [vmem:[%s147 + $0x30] sm:$0x7]
          %vm152 = vcmask 100352
          %v153 = vsel %vm152, %v148, -inf
          %v154 = vrot.slane %v153, 4
          %v155 = vmax.f32 %v153, %v154
          %v156 = vrot.slane %v155, 2
          %v157 = vmax.f32 %v155, %v156
          %v158 = vrot.slane %v157, 1
          %v159 = vmax.f32 %v157, %v158
          %v160 = vsel %vm152, %v149, -inf
          %v161 = vrot.slane %v160, 4
          %v162 = vmax.f32 %v160, %v161
          %v163 = vrot.slane %v162, 2
          %v164 = vmax.f32 %v162, %v163
          %v165 = vrot.slane %v164, 1
          %v166 = vmax.f32 %v164, %v165
          %v167 = vsel %vm152, %v150, -inf
          %v168 = vrot.slane %v167, 4
          %v169 = vmax.f32 %v167, %v168
          %v170 = vrot.slane %v169, 2
          %v171 = vmax.f32 %v169, %v170
          %v172 = vrot.slane %v171, 1
          %v173 = vmax.f32 %v171, %v172
          %v174 = vsel %vm152, %v151, -inf
          %v175 = vrot.slane %v174, 4
          %v176 = vmax.f32 %v174, %v175
          %v177 = vrot.slane %v176, 2
          %v178 = vmax.f32 %v176, %v177
          %v179 = vrot.slane %v178, 1
          %v180 = vmax.f32 %v178, %v179
          %vm181 = vcmask 108552
          %v182 = vsel %vm181, %v148, -inf
          %v183 = vrot.slane %v182, 4
          %v184 = vmax.f32 %v182, %v183
          %v185 = vrot.slane %v184, 2
          %v186 = vmax.f32 %v184, %v185
          %v187 = vrot.slane %v186, 1
          %v188 = vmax.f32 %v186, %v187
          %v189 = vsel %vm181, %v149, -inf
          %v190 = vrot.slane %v189, 4
          %v191 = vmax.f32 %v189, %v190
          %v192 = vrot.slane %v191, 2
          %v193 = vmax.f32 %v191, %v192
          %v194 = vrot.slane %v193, 1
          %v195 = vmax.f32 %v193, %v194
          %v196 = vsel %vm181, %v150, -inf
          %v197 = vrot.slane %v196, 4
          %v198 = vmax.f32 %v196, %v197
          %v199 = vrot.slane %v198, 2
          %v200 = vmax.f32 %v198, %v199
          %v201 = vrot.slane %v200, 1
          %v202 = vmax.f32 %v200, %v201
          %v203 = vsel %vm181, %v151, -inf
          %v204 = vrot.slane %v203, 4
          %v205 = vmax.f32 %v203, %v204
          %v206 = vrot.slane %v205, 2
          %v207 = vmax.f32 %v205, %v206
          %v208 = vrot.slane %v207, 1
          %v209 = vmax.f32 %v207, %v208
          %214 = vrot.lane.b32.xlu0 %v188, 127
          %v215 = vpop.permute.xlu0 %214
          %216 = vrot.lane.b32.xlu0 %v195, 127
          %v217 = vpop.permute.xlu0 %216
          %218 = vrot.lane.b32.xlu0 %v202, 127
          %v219 = vpop.permute.xlu0 %218
          %220 = vrot.lane.b32.xlu0 %v209, 127
          %v221 = vpop.permute.xlu0 %220
          %v226 = vmax.f32 %v159, %v215
          %v227 = vmax.f32 %v166, %v217
          %v228 = vmax.f32 %v173, %v219
          %v229 = vmax.f32 %v180, %v221
          %vm230 = vcmask 116752
          %v231 = vsel %vm230, %v148, -inf
          %v232 = vrot.slane %v231, 4
          %v233 = vmax.f32 %v231, %v232
          %v234 = vrot.slane %v233, 2
          %v235 = vmax.f32 %v233, %v234
          %v236 = vrot.slane %v235, 1
          %v237 = vmax.f32 %v235, %v236
          %v238 = vsel %vm230, %v149, -inf
          %v239 = vrot.slane %v238, 4
          %v240 = vmax.f32 %v238, %v239
          %v241 = vrot.slane %v240, 2
          %v242 = vmax.f32 %v240, %v241
          %v243 = vrot.slane %v242, 1
          %v244 = vmax.f32 %v242, %v243
          %v245 = vsel %vm230, %v150, -inf
          %v246 = vrot.slane %v245, 4
          %v247 = vmax.f32 %v245, %v246
          %v248 = vrot.slane %v247, 2
          %v249 = vmax.f32 %v247, %v248
          %v250 = vrot.slane %v249, 1
          %v251 = vmax.f32 %v249, %v250
          %v252 = vsel %vm230, %v151, -inf
          %v253 = vrot.slane %v252, 4
          %v254 = vmax.f32 %v252, %v253
          %v255 = vrot.slane %v254, 2
          %v256 = vmax.f32 %v254, %v255
          %v257 = vrot.slane %v256, 1
          %v258 = vmax.f32 %v256, %v257
          %263 = vrot.lane.b32.xlu0 %v237, 126
          %v264 = vpop.permute.xlu0 %263
          %265 = vrot.lane.b32.xlu0 %v244, 126
          %v266 = vpop.permute.xlu0 %265
          %267 = vrot.lane.b32.xlu0 %v251, 126
          %v268 = vpop.permute.xlu0 %267
          %269 = vrot.lane.b32.xlu0 %v258, 126
          %v270 = vpop.permute.xlu0 %269
          %v275 = vmax.f32 %v226, %v264
          %v276 = vmax.f32 %v227, %v266
          %v277 = vmax.f32 %v228, %v268
          %v278 = vmax.f32 %v229, %v270
          %s279 = scalar_lea.vmem %s138, %s141
          %vm280 = vcmask 98304
          %281 = vst.msk [vmem:[%s279] sm:$0x1] %vm280, %v275
          %282 = vst.msk [vmem:[%s279 + $0x8] sm:$0x1] %vm280, %v276
          %283 = vst.msk [vmem:[%s279 + $0x10] sm:$0x1] %vm280, %v277
          %284 = vst.msk [vmem:[%s279 + $0x18] sm:$0x1] %vm280, %v278
        $region33: #{tpu_custom_call.1} parent=23 // loop_footer
          %s145 = sadd.s32 1, %s141
        $region34: #{tpu_custom_call.1} parent=23 // loop_footer_branch
          %140 = sbr.rel target = $region30
        $region35: #{tpu_custom_call.1} parent=23 // loop_exit
          _
        %s285 = smul.u32 4, %s15
        %p286 = scmp.lt.s32.totalorder %s285, 7
        %s287 = scalar_select %p286, %s285, 7
        %s288 = smul.addr %s287, 8
        %s289 = scalar_lea.vmem %s1, %s288
        // Predicated region
        $region36: #{tpu_custom_call.1} parent=23 // pred_check
          %p290 = pneg %p59
        $region37: #{tpu_custom_call.1} parent=23 // pred_check_branch
          %292 = sbr.rel (%p290) target = $region39
        $region38: #{tpu_custom_call.1} parent=23 // pred_region
          %s293 = smul.u32 4, %s15
        $region39: #{tpu_custom_call.1} parent=23 // pred_fallthru
          _
      $region24: #{tpu_custom_call.1} parent=5 // pred_fallthru
        _
      %p294 = scmp.le.s32.totalorder 2, %s10
      // Predicated region
      $region40: #{tpu_custom_call.1} parent=5 // pred_check
        %p295 = pneg %p294
      $region41: #{tpu_custom_call.1} parent=5 // pred_check_branch
        %297 = sbr.rel (%p295) target = $region43
      $region42: #{tpu_custom_call.1} parent=5 // pred_region
        %s298 = ssub.s32 %s10, 2
        // Predicated region
        $region44: #{tpu_custom_call.1} parent=42 // pred_check
          %p299 = pneg %p65
        $region45: #{tpu_custom_call.1} parent=42 // pred_check_branch
          %301 = sbr.rel (%p299) target = $region47
        $region46: #{tpu_custom_call.1} parent=42 // pred_region
          %s302 = smul.u32 4, %s16
          %p303 = scmp.lt.s32.totalorder %s302, 7
          %s304 = scalar_select %p303, %s302, 7
          %s305 = smul.addr %s304, 8
          %s306 = scalar_lea.vmem %s1, %s305
        $region47: #{tpu_custom_call.1} parent=42 // pred_fallthru
          _
      $region43: #{tpu_custom_call.1} parent=5 // pred_fallthru
        _
    $region6: #{tpu_custom_call.1} parent=1 // loop_footer
      %s14 = sadd.s32 1, %s10
    $region7: #{tpu_custom_call.1} parent=1 // loop_footer_branch
      %9 = sbr.rel target = $region3
    $region8: #{tpu_custom_call.1} parent=1 // loop_exit
      _
    %307 = vsyncpa [#allocation3], 1
    %s308 = scalar_lea.sflag [#allocation3], 1
    %309 = vsyncpa %s308, 1

</llo_original>
